<compile_context>
chip_gen: v6e
topology: v6e:2x2x1
jax: 0.10.0
libtpu: 0.0.40
codegen_flags: <defaults>
</compile_context>

<pallas_src>
import jax
import jax.numpy as jnp
from jax.experimental import pallas as pl
from jax.experimental.pallas import tpu as pltpu


def _round_up(x, m):
    return ((x + m - 1) // m) * m


# ---------------------------------------------------------------------------
# Fused path: all E ensemble members in one grid step / one MXU pass.
# ---------------------------------------------------------------------------
def _fused_kernel(x_ref, w_ref, b_ref, o_ref):
    # x_ref: (Bp, Kp), w_ref: (Kp, Np), b_ref: (1, Np), o_ref: (Bp, Np)
    acc = jnp.dot(x_ref[...], w_ref[...], preferred_element_type=jnp.float32)
    o_ref[...] = (acc + b_ref[...]).astype(o_ref.dtype)


def _fused_forward(x, W, b):
    E, B, Din = x.shape
    Dout = W.shape[2]
    K, N = E * Din, E * Dout

    # Sublane/lane-friendly padded sizes.
    Bp = _round_up(B, 8)
    Kp = _round_up(K, 128)
    Np = _round_up(N, 128)

    # (E, B, Din) -> (B, E*Din): layout plumbing outside the kernel.
    x_packed = jnp.transpose(x, (1, 0, 2)).reshape(B, K)
    x_packed = jnp.pad(x_packed, ((0, Bp - B), (0, Kp - K)))

    # Block-diagonal weight: W_bd[e*Din + i, f*Dout + o] = (e == f) * W[e, i, o]
    eye = jnp.eye(E, dtype=W.dtype)
    W_bd = (eye[:, None, :, None] * W[:, :, None, :]).reshape(K, N)
    W_bd = jnp.pad(W_bd, ((0, Kp - K), (0, Np - N)))

    b_packed = jnp.pad(b.reshape(1, N), ((0, 0), (0, Np - N)))

    out_packed = pl.pallas_call(
        _fused_kernel,
        out_shape=jax.ShapeDtypeStruct((Bp, Np), x.dtype),
        grid_spec=pltpu.PrefetchScalarGridSpec(
            num_scalar_prefetch=0,
            grid=(1,),
            in_specs=[
                pl.BlockSpec((Bp, Kp), lambda i: (0, 0)),
                pl.BlockSpec((Kp, Np), lambda i: (0, 0)),
                pl.BlockSpec((1, Np), lambda i: (0, 0)),
            ],
            out_specs=pl.BlockSpec((Bp, Np), lambda i: (0, 0)),
        ),
        compiler_params=pltpu.CompilerParams(
            dimension_semantics=("arbitrary",),
        ),
    )(x_packed, W_bd, b_packed)

    # (B, E*Dout) -> (E, B, Dout)
    return jnp.transpose(out_packed[:B, :N].reshape(B, E, Dout), (1, 0, 2))


# ---------------------------------------------------------------------------
# Fallback path for large shapes: per-member grid, bias resident in VMEM.
# ---------------------------------------------------------------------------
def _per_member_kernel(x_ref, w_ref, b_ref, o_ref):
    # x_ref: (B, Din), w_ref: (Din, Dout) (E squeezed), b_ref: (E, 1, Dout)
    e = pl.program_id(0)
    acc = jnp.dot(x_ref[...], w_ref[...], preferred_element_type=jnp.float32)
    o_ref[...] = (acc + b_ref[e]).astype(o_ref.dtype)


def _per_member_forward(x, W, b):
    E, B, Din = x.shape
    Dout = W.shape[2]
    return pl.pallas_call(
        _per_member_kernel,
        out_shape=jax.ShapeDtypeStruct((E, B, Dout), x.dtype),
        grid_spec=pltpu.PrefetchScalarGridSpec(
            num_scalar_prefetch=0,
            grid=(E,),
            in_specs=[
                pl.BlockSpec((None, B, Din), lambda e: (e, 0, 0)),
                pl.BlockSpec((None, Din, Dout), lambda e: (e, 0, 0)),
                # Full-array block with constant index -> bias stays in VMEM,
                # no per-member re-DMA.
                pl.BlockSpec((E, 1, Dout), lambda e: (0, 0, 0)),
            ],
            out_specs=pl.BlockSpec((None, B, Dout), lambda e: (e, 0, 0)),
        ),
        compiler_params=pltpu.CompilerParams(
            dimension_semantics=("parallel",),
        ),
    )(x, W, b)


# Conservative VMEM budget for the fused (block-diagonal) packing so it stays
# safely under the default scoped VMEM on all generations (incl. v7x's 64 MiB
# physical / 32 MiB default scoped), with double-buffering headroom.
_FUSED_VMEM_BUDGET_BYTES = 8 * 1024 * 1024


def parallelized_layer_mlp(x, W, b):
    """Forward pass. x:(E,B,Din), W:(E,Din,Dout), b:(E,1,Dout) -> (E,B,Dout)."""
    E, B, Din = x.shape
    Dout = W.shape[2]
    Bp = _round_up(B, 8)
    Kp = _round_up(E * Din, 128)
    Np = _round_up(E * Dout, 128)
    itemsize = jnp.dtype(x.dtype).itemsize
    fused_bytes = itemsize * (Bp * Kp + Kp * Np + Np + Bp * Np)
    if fused_bytes <= _FUSED_VMEM_BUDGET_BYTES:
        return _fused_forward(x, W, b)
    return _per_member_forward(x, W, b)


def init_params(key, ensemble_size, input_dim, output_dim,
                w_std_value=1.0, b_init_value=0.0):
    # Mirrors reset_parameters(): W = fmod(randn, 2) * w_std, b = zeros + b_init
    w = jax.random.normal(key, (ensemble_size, input_dim, output_dim),
                          dtype=jnp.float32)
    W = jnp.fmod(w, 2.0) * w_std_value
    b = jnp.zeros((ensemble_size, 1, output_dim), dtype=jnp.float32) + b_init_value
    return W, b


if __name__ == "__main__":
    ensemble_size = 4
    batch = 8
    input_dim = 32
    output_dim = 32

    key = jax.random.PRNGKey(0)
    k_w, k_x = jax.random.split(key)

    W, b = init_params(k_w, ensemble_size, input_dim, output_dim)
    x = jax.random.normal(k_x, (ensemble_size, batch, input_dim),
                          dtype=jnp.float32)

    ref = jnp.einsum("ebi,eio->ebo", x, W,
                     precision=jax.lax.Precision.HIGHEST) + b

    # Primary (fused, lane-dense, single MXU pass) path -- auto-selected here.
    out = jax.block_until_ready(jax.jit(parallelized_layer_mlp)(x, W, b))
    assert out.shape == (ensemble_size, batch, output_dim)
    assert jnp.allclose(out, ref, atol=1e-5, rtol=1e-5)

    # Also validate the large-shape fallback path on the same small inputs.
    out_fb = jax.block_until_ready(jax.jit(_per_member_forward)(x, W, b))
    assert out_fb.shape == (ensemble_size, batch, output_dim)
    assert jnp.allclose(out_fb, ref, atol=1e-5, rtol=1e-5)

    print("KERNEL_OK")
</pallas_src>

<mosaic_0001>
module attributes {stable_mosaic.version = 11 : i64} {
  func.func @_fused_kernel(%arg0: i32, %arg1: memref<8x128xf32, #tpu.memory_space<vmem>>, %arg2: memref<128x128xf32, #tpu.memory_space<vmem>>, %arg3: memref<1x128xf32, #tpu.memory_space<vmem>>, %arg4: memref<8x128xf32, #tpu.memory_space<vmem>>) attributes {dimension_semantics = [#tpu.dimension_semantics<arbitrary>], iteration_bounds = array<i64: 1>, scalar_prefetch = 0 : i64, scratch_operands = 0 : i64, tpu.core_type = #tpu.core_type<tc>, window_params = [{pipeline_mode = #tpu.pipeline_mode<synchronous>, transform_indices = @transform_0, window_bounds = array<i64: 8, 128>}, {pipeline_mode = #tpu.pipeline_mode<synchronous>, transform_indices = @transform_1, window_bounds = array<i64: 128, 128>}, {pipeline_mode = #tpu.pipeline_mode<synchronous>, transform_indices = @transform_2, window_bounds = array<i64: 1, 128>}, {pipeline_mode = #tpu.pipeline_mode<synchronous>, transform_indices = @transform_3, window_bounds = array<i64: 8, 128>}]} {
    %c0 = arith.constant 0 : index
    %c0_0 = arith.constant 0 : index
    %0 = vector.load %arg1[%c0, %c0_0] : memref<8x128xf32, #tpu.memory_space<vmem>>, vector<8x128xf32>
    %c0_1 = arith.constant 0 : index
    %c0_2 = arith.constant 0 : index
    %1 = vector.load %arg2[%c0_1, %c0_2] : memref<128x128xf32, #tpu.memory_space<vmem>>, vector<128x128xf32>
    %cst = arith.constant dense<0.000000e+00> : vector<8x128xf32>
    %2 = tpu.matmul %0, %1, %cst {dimension_numbers = #tpu.dot_dimension_numbers<[1], [0], [0], [1], [0, 0, 1, 1], [], []>} : vector<8x128xf32>, vector<128x128xf32>, vector<8x128xf32> -> vector<8x128xf32>
    %c0_3 = arith.constant 0 : index
    %c0_4 = arith.constant 0 : index
    %3 = vector.load %arg3[%c0_3, %c0_4] : memref<1x128xf32, #tpu.memory_space<vmem>>, vector<1x128xf32>
    %4 = vector.broadcast %3 : vector<1x128xf32> to vector<8x128xf32>
    %5 = arith.addf %2, %4 : vector<8x128xf32>
    %c0_5 = arith.constant 0 : index
    %c0_6 = arith.constant 0 : index
    %6 = vector.load %arg4[%c0_5, %c0_6] : memref<8x128xf32, #tpu.memory_space<vmem>>, vector<8x128xf32>
    tpu.vector_store %arg4[%c0_5, %c0_6], %5 {strides = array<i32>} : memref<8x128xf32, #tpu.memory_space<vmem>>, vector<8x128xf32>,
    return
  }
  func.func @transform_0(%arg0: i32) -> (i32, i32) {
    %c0_i32 = arith.constant 0 : i32
    %c0_i32_0 = arith.constant 0 : i32
    %c0_i32_1 = arith.constant 0 : i32
    return %c0_i32, %c0_i32_0 : i32, i32
  }
  func.func @transform_1(%arg0: i32) -> (i32, i32) {
    %c0_i32 = arith.constant 0 : i32
    %c0_i32_0 = arith.constant 0 : i32
    %c0_i32_1 = arith.constant 0 : i32
    return %c0_i32, %c0_i32_0 : i32, i32
  }
  func.func @transform_2(%arg0: i32) -> (i32, i32) {
    %c0_i32 = arith.constant 0 : i32
    %c0_i32_0 = arith.constant 0 : i32
    %c0_i32_1 = arith.constant 0 : i32
    return %c0_i32, %c0_i32_0 : i32, i32
  }
  func.func @transform_3(%arg0: i32) -> (i32, i32) {
    %c0_i32 = arith.constant 0 : i32
    %c0_i32_0 = arith.constant 0 : i32
    %c0_i32_1 = arith.constant 0 : i32
    return %c0_i32, %c0_i32_0 : i32, i32
  }
}

</mosaic_0001>

<llo_original>
// kernel: parallelized_layer_mlp.1
$region0: #{parallelized_layer_mlp.1}
  #allocation0 [shape = 'u32[]', space=smem, size = 0x4, offset = 0x4, fixed_abs, tag = 'smem constant byte address 0x4 - core index']
  #allocation1 [shape = 'u32[144,128]{1,0:T(1,128)}', space=vmem, size = 0x12000, scoped, tag = 'internal scratch']
  %s0 = inlined_call_operand.vmem [shape: f32[8,128], index: 0, kind: input, shape index: {}]
  %s1 = inlined_call_operand.vmem [shape: f32[128,128], index: 1, kind: input, shape index: {}]
  %s2 = inlined_call_operand.vmem [shape: f32[1,128], index: 2, kind: input, shape index: {}]
  %s3 = inlined_call_operand.vmem [shape: f32[8,128], index: 3, kind: output, shape index: {}]
  %s4 = sld [smem:[#allocation0]]
  $region22: #{parallelized_layer_mlp.1} parent=0
    _
  %s6 = ssub.s32 1, %s4
  %s7 = scalar_select 0, %s6, %s4
  // Predicated region
  $region2: #{parallelized_layer_mlp.1} parent=0 // pred_check
    _
  $region3: #{parallelized_layer_mlp.1} parent=0 // pred_check_branch
    %9 = sbr.rel (0) target = $region5
  $region4: #{parallelized_layer_mlp.1} parent=0 // pred_region
    _
  $region5: #{parallelized_layer_mlp.1} parent=0 // pred_fallthru
    _
  // Predicated region
  $region6: #{parallelized_layer_mlp.1} parent=0 // pred_check
    _
  $region7: #{parallelized_layer_mlp.1} parent=0 // pred_check_branch
    %11 = sbr.rel (0) target = $region9
  $region8: #{parallelized_layer_mlp.1} parent=0 // pred_region
    _
  $region9: #{parallelized_layer_mlp.1} parent=0 // pred_fallthru
    _
  // Predicated region
  $region10: #{parallelized_layer_mlp.1} parent=0 // pred_check
    _
  $region11: #{parallelized_layer_mlp.1} parent=0 // pred_check_branch
    %13 = sbr.rel (0) target = $region13
  $region12: #{parallelized_layer_mlp.1} parent=0 // pred_region
    _
  $region13: #{parallelized_layer_mlp.1} parent=0 // pred_fallthru
    _
  %v14 = vld [vmem:[%s0] sm:$0xff]
  %v15 = vld [vmem:[%s1] sm:$0xff]
  %v16 = vld [vmem:[%s1 + $0x8] sm:$0xff]
  %v17 = vld [vmem:[%s1 + $0x10] sm:$0xff]
  %v18 = vld [vmem:[%s1 + $0x18] sm:$0xff]
  %v19 = vld [vmem:[%s1 + $0x20] sm:$0xff]
  %v20 = vld [vmem:[%s1 + $0x28] sm:$0xff]
  %v21 = vld [vmem:[%s1 + $0x30] sm:$0xff]
  %v22 = vld [vmem:[%s1 + $0x38] sm:$0xff]
  %v23 = vld [vmem:[%s1 + $0x40] sm:$0xff]
  %v24 = vld [vmem:[%s1 + $0x48] sm:$0xff]
  %v25 = vld [vmem:[%s1 + $0x50] sm:$0xff]
  %v26 = vld [vmem:[%s1 + $0x58] sm:$0xff]
  %v27 = vld [vmem:[%s1 + $0x60] sm:$0xff]
  %v28 = vld [vmem:[%s1 + $0x68] sm:$0xff]
  %v29 = vld [vmem:[%s1 + $0x70] sm:$0xff]
  %v30 = vld [vmem:[%s1 + $0x78] sm:$0xff]
  %v31 = vld [vmem:[%s2] sm:$0x1]
  %v33 = vlaneseq
  %v34 = vshrl.u32 %v33, 7
  %v35 = vsub.s32 0, %v34
  %v36 = vrot.slane %v31, %v35
  %38 = vmatprep.subr.mxu0 0.0
  %39 = vmatpush1.msra.mxu0 %v30
  %40 = vmatprep.subr.mxu0 0.0
  %41 = vmatpush1.msra.mxu0 %v29
  %42 = vmatprep.subr.mxu0 0.0
  %43 = vmatpush1.msra.mxu0 %v28
  %44 = vmatprep.subr.mxu0 0.0
  %45 = vmatpush1.msra.mxu0 %v27
  %46 = vmatprep.subr.mxu0 0.0
  %47 = vmatpush1.msra.mxu0 %v26
  %48 = vmatprep.subr.mxu0 0.0
  %49 = vmatpush1.msra.mxu0 %v25
  %50 = vmatprep.subr.mxu0 0.0
  %51 = vmatpush1.msra.mxu0 %v24
  %52 = vmatprep.subr.mxu0 0.0
  %53 = vmatpush1.msra.mxu0 %v23
  %54 = vmatprep.subr.mxu0 0.0
  %55 = vmatpush1.msra.mxu0 %v22
  %56 = vmatprep.subr.mxu0 0.0
  %57 = vmatpush1.msra.mxu0 %v21
  %58 = vmatprep.subr.mxu0 0.0
  %59 = vmatpush1.msra.mxu0 %v20
  %60 = vmatprep.subr.mxu0 0.0
  %61 = vmatpush1.msra.mxu0 %v19
  %62 = vmatprep.subr.mxu0 0.0
  %63 = vmatpush1.msra.mxu0 %v18
  %64 = vmatprep.subr.mxu0 0.0
  %65 = vmatpush1.msra.mxu0 %v17
  %66 = vmatprep.subr.mxu0 0.0
  %67 = vmatpush1.msra.mxu0 %v16
  %68 = vmatprep.subr.mxu0 0.0
  %69 = vmatpush1.msra.mxu0 %v15
  %70 = vmatprep.subr.mxu0 0.0
  %71 = vmatpush2.msra.mxu0 0.0
  %72 = vmatprep.subr.mxu0 0.0
  %73 = vmatpush2.msra.mxu0 0.0
  %74 = vmatprep.subr.mxu0 0.0
  %75 = vmatpush2.msra.mxu0 0.0
  %76 = vmatprep.subr.mxu0 0.0
  %77 = vmatpush2.msra.mxu0 0.0
  %78 = vmatprep.subr.mxu0 0.0
  %79 = vmatpush2.msra.mxu0 0.0
  %80 = vmatprep.subr.mxu0 0.0
  %81 = vmatpush2.msra.mxu0 0.0
  %82 = vmatprep.subr.mxu0 0.0
  %83 = vmatpush2.msra.mxu0 0.0
  %84 = vmatprep.subr.mxu0 0.0
  %85 = vmatpush2.msra.mxu0 0.0
  %86 = vmatprep.subr.mxu0 0.0
  %87 = vmatpush2.msra.mxu0 0.0
  %88 = vmatprep.subr.mxu0 0.0
  %89 = vmatpush2.msra.mxu0 0.0
  %90 = vmatprep.subr.mxu0 0.0
  %91 = vmatpush2.msra.mxu0 0.0
  %92 = vmatprep.subr.mxu0 0.0
  %93 = vmatpush2.msra.mxu0 0.0
  %94 = vmatprep.subr.mxu0 0.0
  %95 = vmatpush2.msra.mxu0 0.0
  %96 = vmatprep.subr.mxu0 0.0
  %97 = vmatpush2.msra.mxu0 0.0
  %98 = vmatprep.subr.mxu0 0.0
  %99 = vmatpush2.msra.mxu0 0.0
  %100 = vmatprep.subr.mxu0 0.0
  %101 = vmatpush2.msra.mxu0 0.0
  %102 = vmatprep.mubr.f32.mxu0 0.0
  %103 = vmatmul.mubr.f32.gmra.mxu0 %v14
  %v104 = vpop.f32.mrf.mxu0
  %v105 = vadd.f32 %v36, %v104
  %v106 = vpop.f32.mrf.mxu0
  %107 = vdwg.mxu0
  %108 = vst [vmem:[%s3] sm:$0xff] %v105
  // Predicated region
  $region14: #{parallelized_layer_mlp.1} parent=0 // pred_check
    _
  $region15: #{parallelized_layer_mlp.1} parent=0 // pred_check_branch
    %110 = sbr.rel (0) target = $region17
  $region16: #{parallelized_layer_mlp.1} parent=0 // pred_region
    _
  $region17: #{parallelized_layer_mlp.1} parent=0 // pred_fallthru
    _
  // Predicated region
  $region18: #{parallelized_layer_mlp.1} parent=0 // pred_check
    _
  $region19: #{parallelized_layer_mlp.1} parent=0 // pred_check_branch
    %112 = sbr.rel (0) target = $region21
  $region20: #{parallelized_layer_mlp.1} parent=0 // pred_region
    _
  $region21: #{parallelized_layer_mlp.1} parent=0 // pred_fallthru
    _

</llo_original>
